<compile_context>
chip_gen: v5e
topology: v5e:2x2
jax: 0.10.0
libtpu: 0.0.40
codegen_flags: <defaults>
</compile_context>

<pallas_src>
import math

import jax
import jax.numpy as jnp
from jax.experimental import pallas as pl
from jax.experimental.pallas import tpu as pltpu

_LANE = 128


def _rlgoalnet_kernel(xT_ref, p1_ref, w2_ref, b2_ref, o_ref):
    """One batch tile of the forward pass, batch on the lane axis.

    xT_ref: (K, Bb)   input states, transposed (features, batch-tile)
    p1_ref: (H, K+1)  [W1 (out,in layout) | b1]
    w2_ref: (H, A)    second-layer weights (x @ w convention)
    b2_ref: (A, 1)    second-layer bias (column)
    o_ref : (A, Bb)   Q-values, transposed
    """
    x = xT_ref[...]
    p1 = p1_ref[...]
    w2 = w2_ref[...]
    b2 = b2_ref[...]

    K, Bb = x.shape
    H = p1.shape[0]
    A = w2.shape[1]

    # ---- Layer 1: h = relu(W1 @ x + b1).  K (=3) is static -> unrolled VPU FMAs. ----
    h = jnp.broadcast_to(p1[:, K:K + 1], (H, Bb))          # bias, one hoisted broadcast
    for k in range(K):
        h = h + p1[:, k:k + 1] * x[k:k + 1, :]             # (H,1)*(1,Bb) -> (H,Bb)
    h = jnp.maximum(h, 0.0)

    # ---- Layer 2: q[a,:] = sum_j w2[j,a] * h[j,:] + b2[a]. --------------------------
    # Full-vreg multiply on the dense (H, Bb) activation + cross-sublane sum (XLU slot),
    # instead of H single-sublane FMAs into a 3/8-utilized accumulator.
    rows = []
    for a in range(A):                                     # A (=3) is static -> unrolled
        t = h * w2[:, a:a + 1]                             # (H,Bb)*(H,1) -> (H,Bb)
        rows.append(jnp.sum(t, axis=0, keepdims=True))     # sublane reduce -> (1,Bb)
    q = jnp.concatenate(rows, axis=0) + b2                 # (A,Bb)

    o_ref[...] = q.astype(o_ref.dtype)


def _round_up(n, m):
    return ((n + m - 1) // m) * m


def precompute_params(w1, b1, w2, b2):
    """Build kernel-side parameter slabs once per weight update (hoist out of the step loop)."""
    H = w1.shape[1]
    A = w2.shape[1]
    p1 = jnp.concatenate([w1.T, b1.reshape(H, 1)], axis=1)   # (H, K+1) = [W1 | b1]
    b2c = b2.reshape(A, 1)                                   # (A, 1)
    return p1, w2, b2c


def rlgoalnet_forward_tq(xT, p1, w2, b2c, *, block_b=32768):
    """Fused-layout entry point: xT is (K, Bp) with Bp a multiple of 128; returns qT (A, Bp).

    Use this inside an RL loop that keeps activations in (features, batch) layout to avoid
    the transposed HBM copies of the convenience wrapper.
    """
    K, Bp = xT.shape
    assert Bp % _LANE == 0, "padded batch must be a multiple of 128 lanes"
    H = p1.shape[0]
    A = w2.shape[1]

    # Largest 128-multiple tile <= block_b that divides Bp.
    bb = min(_round_up(block_b, _LANE), Bp)
    bb = _LANE * math.gcd(Bp // _LANE, bb // _LANE)
    nb = Bp // bb

    return pl.pallas_call(
        _rlgoalnet_kernel,
        out_shape=jax.ShapeDtypeStruct((A, Bp), jnp.float32),
        grid=(nb,),
        in_specs=[
            pl.BlockSpec((K, bb), lambda i: (0, i)),      # streamed batch tiles
            pl.BlockSpec((H, K + 1), lambda i: (0, 0)),   # constant -> fetched once, resident
            pl.BlockSpec((H, A), lambda i: (0, 0)),       # constant -> fetched once, resident
            pl.BlockSpec((A, 1), lambda i: (0, 0)),       # constant -> fetched once, resident
        ],
        out_specs=pl.BlockSpec((A, bb), lambda i: (0, i)),
        compiler_params=pltpu.CompilerParams(
            # TODO(synk): on v7x, verify the 2-TensorCore split; switch to CORE_PARALLEL
            # (or an explicit core_map batch split) if wall-clock does not ~halve.
            dimension_semantics=("parallel",),
            vmem_limit_bytes=32 * 1024 * 1024,            # covers v5e's 16 MiB default scope
        ),
    )(xT, p1, w2, b2c)


def rlgoalnet_forward(x, w1, b1, w2, b2, *, block_b=32768):
    """relu(x @ w1 + b1) @ w2 + b2, PyTorch-like (batch, features) interface.

    x : (B, input_size) float32
    w1: (input_size, hidden)   (x @ w convention, i.e. PyTorch weight transposed)
    b1: (hidden,)
    w2: (hidden, actions)
    b2: (actions,)
    returns (B, actions) float32
    """
    B, _ = x.shape
    p1, w2m, b2c = precompute_params(w1, b1, w2, b2)  # hoist per weight update in real use

    bb = min(_round_up(max(B, 1), _LANE), _round_up(block_b, _LANE))
    Bp = _round_up(max(B, 1), bb)
    xT = jnp.pad(x.T, ((0, 0), (0, Bp - B)))          # (K, Bp); padded cols sliced off below

    qT = rlgoalnet_forward_tq(xT, p1, w2m, b2c, block_b=bb)
    return qT[:, :B].T


def init_params(key, input_size=3, hidden_size=16, actions=3):
    """Deterministic init mimicking PyTorch Linear default (uniform +/- 1/sqrt(fan_in))."""
    k1, k2, k3, k4 = jax.random.split(key, 4)
    lim1 = 1.0 / jnp.sqrt(jnp.float32(input_size))
    lim2 = 1.0 / jnp.sqrt(jnp.float32(hidden_size))
    w1 = jax.random.uniform(k1, (input_size, hidden_size), jnp.float32, -lim1, lim1)
    b1 = jax.random.uniform(k2, (hidden_size,), jnp.float32, -lim1, lim1)
    w2 = jax.random.uniform(k3, (hidden_size, actions), jnp.float32, -lim2, lim2)
    b2 = jax.random.uniform(k4, (actions,), jnp.float32, -lim2, lim2)
    return w1, b1, w2, b2


if __name__ == "__main__":
    input_size, hidden_size, actions = 3, 16, 3
    batch = 8

    key = jax.random.PRNGKey(0)
    kx, kp = jax.random.split(key)
    x = jax.random.normal(kx, (batch, input_size), jnp.float32)
    w1, b1, w2, b2 = init_params(kp, input_size, hidden_size, actions)

    out = rlgoalnet_forward(x, w1, b1, w2, b2)
    out = jax.block_until_ready(out)

    # Reference check in plain JAX (same math as the PyTorch module).
    ref = jnp.maximum(x @ w1 + b1, 0.0) @ w2 + b2
    assert out.shape == (batch, actions)
    assert jnp.allclose(out, ref, atol=1e-5, rtol=1e-5)

    print("KERNEL_OK")
</pallas_src>

<mosaic_0001>
module attributes {stable_mosaic.version = 11 : i64} {
  func.func @_rlgoalnet_kernel(%arg0: i32, %arg1: memref<3x128xf32, #tpu.memory_space<vmem>>, %arg2: memref<16x4xf32, #tpu.memory_space<vmem>>, %arg3: memref<16x3xf32, #tpu.memory_space<vmem>>, %arg4: memref<3x1xf32, #tpu.memory_space<vmem>>, %arg5: memref<3x128xf32, #tpu.memory_space<vmem>>) attributes {dimension_semantics = [#tpu.dimension_semantics<parallel>], iteration_bounds = array<i64: 1>, scalar_prefetch = 0 : i64, scratch_operands = 0 : i64, tpu.core_type = #tpu.core_type<tc>, window_params = [{transform_indices = @transform_0, window_bounds = array<i64: 3, 128>}, {pipeline_mode = #tpu.pipeline_mode<synchronous>, transform_indices = @transform_1, window_bounds = array<i64: 16, 4>}, {pipeline_mode = #tpu.pipeline_mode<synchronous>, transform_indices = @transform_2, window_bounds = array<i64: 16, 3>}, {pipeline_mode = #tpu.pipeline_mode<synchronous>, transform_indices = @transform_3, window_bounds = array<i64: 3, 1>}, {transform_indices = @transform_4, window_bounds = array<i64: 3, 128>}]} {
    %c0 = arith.constant 0 : index
    %c0_0 = arith.constant 0 : index
    %0 = vector.load %arg1[%c0, %c0_0] : memref<3x128xf32, #tpu.memory_space<vmem>>, vector<3x128xf32>
    %c0_1 = arith.constant 0 : index
    %c0_2 = arith.constant 0 : index
    %1 = vector.load %arg2[%c0_1, %c0_2] : memref<16x4xf32, #tpu.memory_space<vmem>>, vector<16x4xf32>
    %c0_3 = arith.constant 0 : index
    %c0_4 = arith.constant 0 : index
    %2 = vector.load %arg3[%c0_3, %c0_4] : memref<16x3xf32, #tpu.memory_space<vmem>>, vector<16x3xf32>
    %c0_5 = arith.constant 0 : index
    %c0_6 = arith.constant 0 : index
    %3 = vector.load %arg4[%c0_5, %c0_6] : memref<3x1xf32, #tpu.memory_space<vmem>>, vector<3x1xf32>
    %4 = vector.extract_strided_slice %1 {offsets = [0, 3], sizes = [16, 1], strides = [1, 1]} : vector<16x4xf32> to vector<16x1xf32>
    %5 = vector.shape_cast %4 : vector<16x1xf32> to vector<16x1xf32>
    %6 = vector.broadcast %5 : vector<16x1xf32> to vector<16x128xf32>
    %7 = vector.extract_strided_slice %1 {offsets = [0, 0], sizes = [16, 1], strides = [1, 1]} : vector<16x4xf32> to vector<16x1xf32>
    %8 = vector.extract_strided_slice %0 {offsets = [0, 0], sizes = [1, 128], strides = [1, 1]} : vector<3x128xf32> to vector<1x128xf32>
    %9 = vector.broadcast %7 : vector<16x1xf32> to vector<16x128xf32>
    %10 = vector.broadcast %8 : vector<1x128xf32> to vector<16x128xf32>
    %11 = arith.mulf %9, %10 : vector<16x128xf32>
    %12 = arith.addf %6, %11 : vector<16x128xf32>
    %13 = vector.extract_strided_slice %1 {offsets = [0, 1], sizes = [16, 1], strides = [1, 1]} : vector<16x4xf32> to vector<16x1xf32>
    %14 = vector.extract_strided_slice %0 {offsets = [1, 0], sizes = [1, 128], strides = [1, 1]} : vector<3x128xf32> to vector<1x128xf32>
    %15 = vector.broadcast %13 : vector<16x1xf32> to vector<16x128xf32>
    %16 = vector.broadcast %14 : vector<1x128xf32> to vector<16x128xf32>
    %17 = arith.mulf %15, %16 : vector<16x128xf32>
    %18 = arith.addf %12, %17 : vector<16x128xf32>
    %19 = vector.extract_strided_slice %1 {offsets = [0, 2], sizes = [16, 1], strides = [1, 1]} : vector<16x4xf32> to vector<16x1xf32>
    %20 = vector.extract_strided_slice %0 {offsets = [2, 0], sizes = [1, 128], strides = [1, 1]} : vector<3x128xf32> to vector<1x128xf32>
    %21 = vector.broadcast %19 : vector<16x1xf32> to vector<16x128xf32>
    %22 = vector.broadcast %20 : vector<1x128xf32> to vector<16x128xf32>
    %23 = arith.mulf %21, %22 : vector<16x128xf32>
    %24 = arith.addf %18, %23 : vector<16x128xf32>
    %cst = arith.constant 0.000000e+00 : f32
    %25 = vector.broadcast %cst : f32 to vector<16x128xf32>
    %26 = arith.maximumf %24, %25 : vector<16x128xf32>
    %27 = vector.extract_strided_slice %2 {offsets = [0, 0], sizes = [16, 1], strides = [1, 1]} : vector<16x3xf32> to vector<16x1xf32>
    %28 = vector.broadcast %27 : vector<16x1xf32> to vector<16x128xf32>
    %29 = arith.mulf %26, %28 : vector<16x128xf32>
    %cst_7 = arith.constant dense<0.000000e+00> : vector<128xf32>
    %30 = vector.multi_reduction <add>, %29, %cst_7 [0] : vector<16x128xf32> to vector<128xf32>
    %31 = vector.shape_cast %30 : vector<128xf32> to vector<1x128xf32>
    %32 = vector.extract_strided_slice %2 {offsets = [0, 1], sizes = [16, 1], strides = [1, 1]} : vector<16x3xf32> to vector<16x1xf32>
    %33 = vector.broadcast %32 : vector<16x1xf32> to vector<16x128xf32>
    %34 = arith.mulf %26, %33 : vector<16x128xf32>
    %cst_8 = arith.constant dense<0.000000e+00> : vector<128xf32>
    %35 = vector.multi_reduction <add>, %34, %cst_8 [0] : vector<16x128xf32> to vector<128xf32>
    %36 = vector.shape_cast %35 : vector<128xf32> to vector<1x128xf32>
    %37 = vector.extract_strided_slice %2 {offsets = [0, 2], sizes = [16, 1], strides = [1, 1]} : vector<16x3xf32> to vector<16x1xf32>
    %38 = vector.broadcast %37 : vector<16x1xf32> to vector<16x128xf32>
    %39 = arith.mulf %26, %38 : vector<16x128xf32>
    %cst_9 = arith.constant dense<0.000000e+00> : vector<128xf32>
    %40 = vector.multi_reduction <add>, %39, %cst_9 [0] : vector<16x128xf32> to vector<128xf32>
    %41 = vector.shape_cast %40 : vector<128xf32> to vector<1x128xf32>
    %42 = tpu.concatenate %31, %36, %41 in 0 : vector<1x128xf32>, vector<1x128xf32>, vector<1x128xf32> -> vector<3x128xf32>
    %43 = vector.broadcast %3 : vector<3x1xf32> to vector<3x128xf32>
    %44 = arith.addf %42, %43 : vector<3x128xf32>
    %c0_10 = arith.constant 0 : index
    %c0_11 = arith.constant 0 : index
    %45 = vector.load %arg5[%c0_10, %c0_11] : memref<3x128xf32, #tpu.memory_space<vmem>>, vector<3x128xf32>
    tpu.vector_store %arg5[%c0_10, %c0_11], %44 {strides = array<i32>} : memref<3x128xf32, #tpu.memory_space<vmem>>, vector<3x128xf32>,
    return
  }
  func.func @transform_0(%arg0: i32) -> (i32, i32) {
    %c0_i32 = arith.constant 0 : i32
    %c0_i32_0 = arith.constant 0 : i32
    return %c0_i32, %arg0 : i32, i32
  }
  func.func @transform_1(%arg0: i32) -> (i32, i32) {
    %c0_i32 = arith.constant 0 : i32
    %c0_i32_0 = arith.constant 0 : i32
    %c0_i32_1 = arith.constant 0 : i32
    return %c0_i32, %c0_i32_0 : i32, i32
  }
  func.func @transform_2(%arg0: i32) -> (i32, i32) {
    %c0_i32 = arith.constant 0 : i32
    %c0_i32_0 = arith.constant 0 : i32
    %c0_i32_1 = arith.constant 0 : i32
    return %c0_i32, %c0_i32_0 : i32, i32
  }
  func.func @transform_3(%arg0: i32) -> (i32, i32) {
    %c0_i32 = arith.constant 0 : i32
    %c0_i32_0 = arith.constant 0 : i32
    %c0_i32_1 = arith.constant 0 : i32
    return %c0_i32, %c0_i32_0 : i32, i32
  }
  func.func @transform_4(%arg0: i32) -> (i32, i32) {
    %c0_i32 = arith.constant 0 : i32
    %c0_i32_0 = arith.constant 0 : i32
    return %c0_i32, %arg0 : i32, i32
  }
}

</mosaic_0001>

<llo_original>
// kernel: tpu_custom_call.1
$region0: #{tpu_custom_call.1}
  #allocation0 [shape = 'u32[]', space=smem, size = 0x4, offset = 0x4, fixed_abs, tag = 'smem constant byte address 0x4 - core index']
  #allocation1 [shape = 'u32[72,128]{1,0:T(1,128)}', space=vmem, size = 0x9000, scoped, tag = 'internal scratch']
  %s0 = inlined_call_operand.vmem [shape: f32[3,128], index: 0, kind: input, shape index: {}]
  %s1 = inlined_call_operand.vmem [shape: f32[16,4], index: 1, kind: input, shape index: {}]
  %s2 = inlined_call_operand.vmem [shape: f32[16,3], index: 2, kind: input, shape index: {}]
  %s3 = inlined_call_operand.vmem [shape: f32[3,1], index: 3, kind: input, shape index: {}]
  %s4 = inlined_call_operand.hbm [shape: f32[3,128], index: 4, kind: output, shape index: {}]
  %s5 = sld [smem:[#allocation0]]
  $region26: #{tpu_custom_call.1} parent=0
    _
  %s7 = ssub.s32 1, %s5
  %s8 = scalar_select 0, %s7, %s5
  $region1: #{tpu_custom_call.1} parent=0
    #allocation2 [shape = 'u8[2048]{0}', space=vmem, size = 0x800, scoped, tag = 'output window, operand 0, single buffered']
    #allocation3 [shape = 's32[1]{0}', space=sflag, size = 0x4, scoped, tag = 'scoped memory for tpu_custom_call.1']
    %9 = vsyncpa [#allocation3], 0
    // Predicated region
    $region2: #{tpu_custom_call.1} parent=1 // pred_check
      _
    $region3: #{tpu_custom_call.1} parent=1 // pred_check_branch
      %11 = sbr.rel (0) target = $region5
    $region4: #{tpu_custom_call.1} parent=1 // pred_region
      _
    $region5: #{tpu_custom_call.1} parent=1 // pred_fallthru
      _
    // Predicated region
    $region6: #{tpu_custom_call.1} parent=1 // pred_check
      _
    $region7: #{tpu_custom_call.1} parent=1 // pred_check_branch
      %13 = sbr.rel (0) target = $region9
    $region8: #{tpu_custom_call.1} parent=1 // pred_region
      _
    $region9: #{tpu_custom_call.1} parent=1 // pred_fallthru
      _
    // Predicated region
    $region10: #{tpu_custom_call.1} parent=1 // pred_check
      _
    $region11: #{tpu_custom_call.1} parent=1 // pred_check_branch
      %15 = sbr.rel (0) target = $region13
    $region12: #{tpu_custom_call.1} parent=1 // pred_region
      _
    $region13: #{tpu_custom_call.1} parent=1 // pred_fallthru
      _
    // Predicated region
    $region14: #{tpu_custom_call.1} parent=1 // pred_check
      _
    $region15: #{tpu_custom_call.1} parent=1 // pred_check_branch
      %17 = sbr.rel (0) target = $region17
    $region16: #{tpu_custom_call.1} parent=1 // pred_region
      _
    $region17: #{tpu_custom_call.1} parent=1 // pred_fallthru
      _
    %v18 = vld [vmem:[%s0] sm:$0x7]
    %v19 = vld [vmem:[%s1] sm:$0xff]
    %v20 = vld [vmem:[%s1 + $0x8] sm:$0xff]
    %v21 = vld [vmem:[%s2] sm:$0xff]
    %v22 = vld [vmem:[%s2 + $0x8] sm:$0xff]
    %v23 = vld [vmem:[%s3] sm:$0x7]
    %25 = vset.pattern.permute.xlu0 3
    %26 = vperm.xlu0 %25, %v19
    %v27 = vpop.permute.xlu0 %26
    %30 = vset.pattern.permute.xlu0 3
    %31 = vperm.xlu0 %30, %v20
    %v32 = vpop.permute.xlu0 %31
    %34 = vset.pattern.permute.xlu0 0
    %35 = vperm.xlu0 %34, %v19
    %v36 = vpop.permute.xlu0 %35
    %38 = vset.pattern.permute.xlu0 0
    %39 = vperm.xlu0 %38, %v20
    %v40 = vpop.permute.xlu0 %39
    %v42 = vperm.slane %v18, 0
    %v43 = vmul.f32 %v36, %v42
    %v44 = vmul.f32 %v40, %v42
    %v45 = vadd.f32 %v27, %v43
    %v46 = vadd.f32 %v32, %v44
    %47 = vset.pattern.permute.xlu0 1
    %48 = vperm.xlu0 %47, %v19
    %v49 = vpop.permute.xlu0 %48
    %51 = vset.pattern.permute.xlu0 1
    %52 = vperm.xlu0 %51, %v20
    %v53 = vpop.permute.xlu0 %52
    %v55 = vperm.slane %v18, 1
    %v56 = vmul.f32 %v49, %v55
    %v57 = vmul.f32 %v53, %v55
    %v58 = vadd.f32 %v45, %v56
    %v59 = vadd.f32 %v46, %v57
    %60 = vset.pattern.permute.xlu0 2
    %61 = vperm.xlu0 %60, %v19
    %v62 = vpop.permute.xlu0 %61
    %64 = vset.pattern.permute.xlu0 2
    %65 = vperm.xlu0 %64, %v20
    %v66 = vpop.permute.xlu0 %65
    %v68 = vperm.slane %v18, 2
    %v69 = vmul.f32 %v62, %v68
    %v70 = vmul.f32 %v66, %v68
    %v71 = vadd.f32 %v58, %v69
    %v72 = vadd.f32 %v59, %v70
    %v73 = vmax.f32 %v71, 0.0
    %v74 = vmax.f32 %v72, 0.0
    %76 = vset.pattern.permute.xlu0 0
    %77 = vperm.xlu0 %76, %v21
    %v78 = vpop.permute.xlu0 %77
    %81 = vset.pattern.permute.xlu0 0
    %82 = vperm.xlu0 %81, %v22
    %v83 = vpop.permute.xlu0 %82
    %v85 = vmul.f32 %v73, %v78
    %v86 = vmul.f32 %v74, %v83
    %v87 = vadd.f32 %v85, %v86
    %v88 = vrot.slane %v87, 4
    %v89 = vadd.f32 %v87, %v88
    %v90 = vrot.slane %v89, 2
    %v91 = vadd.f32 %v89, %v90
    %v92 = vrot.slane %v91, 1
    %v93 = vadd.f32 %v91, %v92
    %94 = vset.pattern.permute.xlu0 1
    %95 = vperm.xlu0 %94, %v21
    %v96 = vpop.permute.xlu0 %95
    %98 = vset.pattern.permute.xlu0 1
    %99 = vperm.xlu0 %98, %v22
    %v100 = vpop.permute.xlu0 %99
    %v102 = vmul.f32 %v73, %v96
    %v103 = vmul.f32 %v74, %v100
    %v104 = vadd.f32 %v102, %v103
    %v105 = vrot.slane %v104, 4
    %v106 = vadd.f32 %v104, %v105
    %v107 = vrot.slane %v106, 2
    %v108 = vadd.f32 %v106, %v107
    %v109 = vrot.slane %v108, 1
    %v110 = vadd.f32 %v108, %v109
    %111 = vset.pattern.permute.xlu0 2
    %112 = vperm.xlu0 %111, %v21
    %v113 = vpop.permute.xlu0 %112
    %115 = vset.pattern.permute.xlu0 2
    %116 = vperm.xlu0 %115, %v22
    %v117 = vpop.permute.xlu0 %116
    %v119 = vmul.f32 %v73, %v113
    %v120 = vmul.f32 %v74, %v117
    %v121 = vadd.f32 %v119, %v120
    %v122 = vrot.slane %v121, 4
    %v123 = vadd.f32 %v121, %v122
    %v124 = vrot.slane %v123, 2
    %v125 = vadd.f32 %v123, %v124
    %v126 = vrot.slane %v125, 1
    %v127 = vadd.f32 %v125, %v126
    %vm128 = vcmask 1040384
    %v129 = vsel %vm128, %v93, %v110
    %vm130 = vcmask 1041408
    %v131 = vsel %vm130, %v129, %v127
    %133 = vset.pattern.permute.xlu0 0
    %134 = vperm.xlu0 %133, %v23
    %v135 = vpop.permute.xlu0 %134
    %v137 = vadd.f32 %v131, %v135
    %138 = vst [vmem:[#allocation2] sm:$0x7] %v137
    // Predicated region
    $region18: #{tpu_custom_call.1} parent=1 // pred_check
      _
    $region19: #{tpu_custom_call.1} parent=1 // pred_check_branch
      %140 = sbr.rel (0) target = $region21
    $region20: #{tpu_custom_call.1} parent=1 // pred_region
      %142 = vsyncadd [#allocation3], 0
      %s144 = sshll.u32 [#allocation2], 4
      %s145 = int_to_ptr.vmem [resolvable:$true] %s144
      %s146 = sshll.u32 %s4, 4
      %s147 = int_to_ptr.hbm [resolvable:$true] %s146
      %149 = dma.vmem_to_hbm [thread:$0]  %s145, 64, %s147, [#allocation3]
    $region21: #{tpu_custom_call.1} parent=1 // pred_fallthru
      _
    // Predicated region
    $region22: #{tpu_custom_call.1} parent=1 // pred_check
      _
    $region23: #{tpu_custom_call.1} parent=1 // pred_check_branch
      %151 = sbr.rel (0) target = $region25
    $region24: #{tpu_custom_call.1} parent=1 // pred_region
      %153 = dma.done [#allocation3], 64
    $region25: #{tpu_custom_call.1} parent=1 // pred_fallthru
      _
    %154 = vsyncpa [#allocation3], 1

</llo_original>
